<compile_context>
chip_gen: v7x
topology: tpu7x:2x2x1
jax: 0.10.0
libtpu: 0.0.40
codegen_flags: <defaults>
</compile_context>

<pallas_src>
import functools

import jax
import jax.numpy as jnp
from jax.experimental import pallas as pl
from jax.experimental.pallas import tpu as pltpu

# ----- MultiBoxLoss "cfg" constants (deterministic, in-script) --------------
NUM_CLASSES = 8
OVERLAP_THRESH = 0.5
NEG_POS_RATIO = 3
VARIANCE = (0.1, 0.2)


# ============================================================================
# Matching glue (plain JAX) — mirrors point_form / jaccard / encode / match
# ============================================================================
def point_form(boxes):
    return jnp.concatenate(
        [boxes[:, :2] - boxes[:, 2:] / 2.0, boxes[:, :2] + boxes[:, 2:] / 2.0],
        axis=1)


def intersect(box_a, box_b):
    # pairwise intersection: box_a (A,4), box_b (B,4) in point form -> (A,B)
    max_xy = jnp.minimum(box_a[:, None, 2:], box_b[None, :, 2:])
    min_xy = jnp.maximum(box_a[:, None, :2], box_b[None, :, :2])
    inter = jnp.clip(max_xy - min_xy, 0.0, None)
    return inter[..., 0] * inter[..., 1]


def jaccard(box_a, box_b):
    inter = intersect(box_a, box_b)
    area_a = ((box_a[:, 2] - box_a[:, 0]) * (box_a[:, 3] - box_a[:, 1]))[:, None]
    area_b = ((box_b[:, 2] - box_b[:, 0]) * (box_b[:, 3] - box_b[:, 1]))[None, :]
    union = area_a + area_b - inter
    return inter / union


def encode(matched, priors, variances):
    g_cxcy = (matched[:, :2] + matched[:, 2:]) / 2.0 - priors[:, :2]
    g_cxcy = g_cxcy / (variances[0] * priors[:, 2:])
    g_wh = (matched[:, 2:] - matched[:, :2]) / priors[:, 2:]
    g_wh = jnp.log(g_wh + 1e-5) / variances[1]   # reference uses log(g_wh + 1e-05)
    return jnp.concatenate([g_cxcy, g_wh], axis=1)


def match_one(threshold, truths, priors, variances, labels):
    """truths: (num_obj, 4) point-form, labels: (num_obj,) -> (loc_t, conf_t)."""
    overlaps = jaccard(truths, point_form(priors))          # (num_obj, P)
    best_prior_idx = jnp.argmax(overlaps, axis=1)           # (num_obj,)
    best_truth_overlap = jnp.max(overlaps, axis=0)          # (P,)
    best_truth_idx = jnp.argmax(overlaps, axis=0)           # (P,)
    # ensure every gt matches its best prior
    best_truth_overlap = best_truth_overlap.at[best_prior_idx].set(2.0)
    best_truth_idx = best_truth_idx.at[best_prior_idx].set(
        jnp.arange(truths.shape[0], dtype=best_truth_idx.dtype))
    matches = truths[best_truth_idx]                        # (P, 4)
    conf = labels[best_truth_idx].astype(jnp.int32) + 1     # (P,)
    conf = jnp.where(best_truth_overlap < threshold, 0, conf)
    loc = encode(matches, priors, variances)                # (P, 4)
    return loc, conf


# ============================================================================
# Pallas kernel: per-image losses + hard negative mining (one grid point / img)
# ============================================================================
def _multibox_loss_kernel(loc_p_ref, loc_t_ref, conf_ref, tgt_ref, out_ref, *,
                          negpos_ratio, num_priors):
    # Per-image blocks, priors on the lane axis (lane-dense).
    loc_p = loc_p_ref[...].astype(jnp.float32)      # (4, Pp)
    loc_t = loc_t_ref[...].astype(jnp.float32)      # (4, Pp)
    conf = conf_ref[...].astype(jnp.float32)        # (C, Pp)
    tgt = tgt_ref[...]                              # (1, Pp) int32 (0 at padding)

    C, Pp = conf.shape

    pos = tgt > 0                                   # (1, Pp)
    posf = pos.astype(jnp.float32)

    # ---- localization: smooth-L1 summed over positive priors (beta = 1.0) --
    # mask the residual first: smooth_l1(0) == 0, so padding/negatives drop out.
    d = (loc_p - loc_t) * posf                      # (1,Pp) broadcast over 4 rows
    ad = jnp.abs(d)
    loss_l = jnp.sum(jnp.where(ad < 1.0, 0.5 * d * d, ad - 0.5))

    # ---- confidence: ONE per-prior log-sum-exp, reused for rank + CE -------
    cmax = jnp.max(conf, axis=0, keepdims=True)                         # (1, Pp)
    lse = jnp.log(jnp.sum(jnp.exp(conf - cmax), axis=0, keepdims=True)) + cmax
    cls_iota = jax.lax.broadcasted_iota(jnp.int32, (C, Pp), 0)
    gathered = jnp.sum(conf * (cls_iota == tgt).astype(jnp.float32),
                       axis=0, keepdims=True)                           # (1, Pp)
    ce = lse - gathered                                                 # >= 0

    lane = jax.lax.broadcasted_iota(jnp.int32, (1, Pp), 1)
    valid = lane < num_priors                       # real (non-padded) priors

    # ranking loss: zeroed at positives (and padding), as in the reference.
    lr = jnp.where(jnp.logical_and(valid, jnp.logical_not(pos)), ce, 0.0)
    lr = jnp.abs(lr)                                # insurance: no -0.0 bit keys

    num_pos = jnp.sum(posf)                                             # scalar
    k = jnp.minimum(negpos_ratio * num_pos.astype(jnp.int32),
                    num_priors - 1)                 # num_neg for this image

    # CE contribution of positives (always selected via pos OR neg).
    ce_pos = jnp.sum(ce * posf)

    # ---- hard negative mining: k-th largest of lr via bit-space search -----
    # lr >= 0 ==> its f32 bit pattern is a monotone non-negative int32 key.
    # Find the largest key t with count(key >= t) >= k; that t is exactly the
    # bit pattern of the k-th largest value.  31 steps x O(P) lane compares.
    lr_bits = pltpu.bitcast(lr, jnp.int32)          # (1, Pp)

    def bs_step(_, carry):
        lo, hi = carry
        mid = lo + ((hi - lo + 1) >> 1)
        cnt = jnp.sum((lr_bits >= mid).astype(jnp.int32))
        take = cnt >= k
        return (jnp.where(take, mid, lo), jnp.where(take, hi, mid - 1))

    lo, _ = jax.lax.fori_loop(0, 31, bs_step,
                              (jnp.int32(0), jnp.int32(2147483646)))

    # Value of the k-th largest ranking loss (ties all share this value, so
    # the selected-negative sum is independent of the tie-break order).
    v = jnp.max(jnp.where(lr_bits == lo, lr, 0.0))
    above = (lr > v).astype(jnp.float32)
    cnt_gt = jnp.sum(above)
    neg_sum = jnp.sum(lr * above) + (k.astype(jnp.float32) - cnt_gt) * v
    neg_sum = jnp.where(k > 0, neg_sum, 0.0)

    loss_c = ce_pos + neg_sum

    # ---- per-image partial sums into a lane-dense (8, 128) output block ----
    row = jax.lax.broadcasted_iota(jnp.int32, (8, 128), 0)
    out_ref[...] = jnp.where(row == 0, loss_l,
                   jnp.where(row == 1, loss_c,
                   jnp.where(row == 2, num_pos, 0.0)))


def multibox_loss(loc_data, conf_data, priors, targets, *,
                  num_classes=NUM_CLASSES,
                  overlap_thresh=OVERLAP_THRESH,
                  neg_pos=NEG_POS_RATIO,
                  variance=VARIANCE):
    """Equivalent of MultiBoxLoss.forward((loc, conf, priors), targets)."""
    del num_classes  # implied by conf_data.shape[-1]
    B, P, _ = loc_data.shape
    C = conf_data.shape[-1]
    priors = priors[:P, :].astype(jnp.float32)

    def per_image(t):
        return match_one(overlap_thresh, t[:, :4], priors, variance, t[:, 4])

    loc_t, conf_t = jax.vmap(per_image)(targets)     # (B,P,4) f32, (B,P) i32
    conf_t = conf_t.astype(jnp.int32)

    # --- lane-dense relayout: priors -> lanes, pad P up to a multiple of 128.
    # (layout plumbing only; predictions keep their native dtype — no f32
    #  upcast copy in HBM, the kernel upconverts on load.)
    Pp = ((P + 127) // 128) * 128
    pad = Pp - P

    def to_lanes(x):                                 # (B, P, K) -> (B, K, Pp)
        x = jnp.swapaxes(x, 1, 2)
        return jnp.pad(x, ((0, 0), (0, 0), (0, pad)))

    loc_p_l = to_lanes(loc_data)
    conf_l = to_lanes(conf_data)
    loc_t_l = to_lanes(loc_t.astype(jnp.float32))
    tgt_l = jnp.pad(conf_t, ((0, 0), (0, pad)))[:, None, :]   # (B, 1, Pp) i32

    kernel = functools.partial(_multibox_loss_kernel,
                               negpos_ratio=neg_pos, num_priors=P)
    partial_sums = pl.pallas_call(
        kernel,
        out_shape=jax.ShapeDtypeStruct((B, 8, 128), jnp.float32),
        grid=(B,),
        in_specs=[
            pl.BlockSpec((None, 4, Pp), lambda b: (b, 0, 0)),   # loc preds
            pl.BlockSpec((None, 4, Pp), lambda b: (b, 0, 0)),   # loc targets
            pl.BlockSpec((None, C, Pp), lambda b: (b, 0, 0)),   # conf preds
            pl.BlockSpec((None, 1, Pp), lambda b: (b, 0, 0)),   # conf targets
        ],
        out_specs=pl.BlockSpec((None, 8, 128), lambda b: (b, 0, 0)),
        compiler_params=pltpu.CompilerParams(
            dimension_semantics=("parallel",),       # both TensorCores on v7x
            vmem_limit_bytes=48 * 1024 * 1024),
    )(loc_p_l, loc_t_l, conf_l, tgt_l)

    # Tiny cross-image reduction + normalisation (couples the parallel images,
    # so it lives in the wrapper).
    loss_l = jnp.sum(partial_sums[:, 0, 0])
    loss_c = jnp.sum(partial_sums[:, 1, 0])
    n = jnp.maximum(jnp.sum(partial_sums[:, 2, 0]), 1.0)   # zero-positive guard
    return loss_l / n, loss_c / n


# ============================================================================
# Pure-JAX reference (original sort-based algorithm, used only for validation)
# ============================================================================
def _loss_ref(loc_data, conf_data, loc_t, conf_t, negpos_ratio):
    B, P, C = conf_data.shape
    pos = conf_t > 0
    d = loc_data - loc_t
    ad = jnp.abs(d)
    sl1 = jnp.where(ad < 1.0, 0.5 * d * d, ad - 0.5)
    loss_l = jnp.sum(jnp.where(pos[..., None], sl1, 0.0))

    x_max = jnp.max(conf_data)
    lse = jnp.log(jnp.sum(jnp.exp(conf_data - x_max), axis=-1)) + x_max
    gathered = jnp.take_along_axis(conf_data, conf_t[..., None], axis=-1)[..., 0]
    loss_rank = jnp.where(pos, 0.0, lse - gathered)

    order = jnp.argsort(-loss_rank, axis=1)           # descending sort
    idx_rank = jnp.argsort(order, axis=1)
    num_pos = jnp.sum(pos.astype(jnp.int32), axis=1, keepdims=True)
    num_neg = jnp.minimum(negpos_ratio * num_pos, P - 1)
    neg = idx_rank < num_neg
    sel = jnp.logical_or(pos, neg)

    row_max = jnp.max(conf_data, axis=-1, keepdims=True)
    row_lse = jnp.log(jnp.sum(jnp.exp(conf_data - row_max), axis=-1)) + row_max[..., 0]
    ce = row_lse - gathered
    loss_c = jnp.sum(jnp.where(sel, ce, 0.0))

    n = jnp.maximum(jnp.sum(num_pos).astype(jnp.float32), 1.0)
    return loss_l / n, loss_c / n


# ============================================================================
if __name__ == "__main__":
    key = jax.random.PRNGKey(0)
    B, P, C, NOBJ = 2, 64, NUM_CLASSES, 3
    k1, k2, k3, k4, k5, k6, k7 = jax.random.split(key, 7)

    # predictions
    loc_data = 0.1 * jax.random.normal(k1, (B, P, 4), dtype=jnp.float32)
    conf_data = jax.random.normal(k2, (B, P, C), dtype=jnp.float32)

    # priors in center-size form
    prior_c = jax.random.uniform(k3, (P, 2), minval=0.2, maxval=0.8)
    prior_wh = jax.random.uniform(k4, (P, 2), minval=0.1, maxval=0.4)
    priors = jnp.concatenate([prior_c, prior_wh], axis=1).astype(jnp.float32)

    # ground-truth targets: [xmin, ymin, xmax, ymax, label]
    gt_min = jax.random.uniform(k5, (B, NOBJ, 2), minval=0.05, maxval=0.55)
    gt_wh = jax.random.uniform(k6, (B, NOBJ, 2), minval=0.15, maxval=0.4)
    gt_max = gt_min + gt_wh
    labels = jax.random.randint(k7, (B, NOBJ), 0, C - 1).astype(jnp.float32)
    targets = jnp.concatenate([gt_min, gt_max, labels[..., None]], axis=-1)

    loss_l, loss_c = multibox_loss(loc_data, conf_data, priors, targets)
    jax.block_until_ready((loss_l, loss_c))

    # validate against pure-JAX reference (same matching glue)
    loc_t, conf_t = jax.vmap(
        lambda t: match_one(OVERLAP_THRESH, t[:, :4], priors, VARIANCE, t[:, 4])
    )(targets)
    ref_l, ref_c = _loss_ref(loc_data, conf_data, loc_t,
                             conf_t.astype(jnp.int32), NEG_POS_RATIO)
    assert jnp.allclose(loss_l, ref_l, rtol=1e-4, atol=1e-4), (loss_l, ref_l)
    assert jnp.allclose(loss_c, ref_c, rtol=1e-4, atol=1e-4), (loss_c, ref_c)

    print("KERNEL_OK")
</pallas_src>

<mosaic_0001>
module attributes {stable_mosaic.version = 11 : i64} {
  func.func @_multibox_loss_kernel(%arg0: i32, %arg1: memref<1x4x128xf32, #tpu.memory_space<vmem>>, %arg2: memref<1x4x128xf32, #tpu.memory_space<vmem>>, %arg3: memref<1x8x128xf32, #tpu.memory_space<vmem>>, %arg4: memref<1x1x128xi32, #tpu.memory_space<vmem>>, %arg5: memref<1x8x128xf32, #tpu.memory_space<vmem>>) attributes {dimension_semantics = [#tpu.dimension_semantics<parallel>], iteration_bounds = array<i64: 2>, scalar_prefetch = 0 : i64, scratch_operands = 0 : i64, tpu.core_type = #tpu.core_type<tc>, window_params = [{transform_indices = @transform_0, window_bounds = array<i64: 1, 4, 128>}, {transform_indices = @transform_1, window_bounds = array<i64: 1, 4, 128>}, {transform_indices = @transform_2, window_bounds = array<i64: 1, 8, 128>}, {transform_indices = @transform_3, window_bounds = array<i64: 1, 1, 128>}, {transform_indices = @transform_4, window_bounds = array<i64: 1, 8, 128>}]} {
    %c0 = arith.constant 0 : index
    %c0_0 = arith.constant 0 : index
    %c0_1 = arith.constant 0 : index
    %0 = vector.load %arg1[%c0, %c0_0, %c0_1] : memref<1x4x128xf32, #tpu.memory_space<vmem>>, vector<1x4x128xf32>
    %1 = vector.shape_cast %0 : vector<1x4x128xf32> to vector<4x128xf32>
    %c0_2 = arith.constant 0 : index
    %c0_3 = arith.constant 0 : index
    %c0_4 = arith.constant 0 : index
    %2 = vector.load %arg2[%c0_2, %c0_3, %c0_4] : memref<1x4x128xf32, #tpu.memory_space<vmem>>, vector<1x4x128xf32>
    %3 = vector.shape_cast %2 : vector<1x4x128xf32> to vector<4x128xf32>
    %c0_5 = arith.constant 0 : index
    %c0_6 = arith.constant 0 : index
    %c0_7 = arith.constant 0 : index
    %4 = vector.load %arg3[%c0_5, %c0_6, %c0_7] : memref<1x8x128xf32, #tpu.memory_space<vmem>>, vector<1x8x128xf32>
    %5 = vector.shape_cast %4 : vector<1x8x128xf32> to vector<8x128xf32>
    %c0_8 = arith.constant 0 : index
    %c0_9 = arith.constant 0 : index
    %c0_10 = arith.constant 0 : index
    %6 = vector.load %arg4[%c0_8, %c0_9, %c0_10] : memref<1x1x128xi32, #tpu.memory_space<vmem>>, vector<1x1x128xi32>
    %7 = vector.shape_cast %6 : vector<1x1x128xi32> to vector<1x128xi32>
    %c0_i32 = arith.constant 0 : i32
    %8 = vector.broadcast %c0_i32 : i32 to vector<1x128xi32>
    %9 = arith.cmpi sgt, %7, %8 : vector<1x128xi32>
    %10 = arith.extui %9 : vector<1x128xi1> to vector<1x128xi32>
    %11 = arith.sitofp %10 : vector<1x128xi32> to vector<1x128xf32>
    %12 = arith.subf %1, %3 : vector<4x128xf32>
    %13 = vector.broadcast %11 : vector<1x128xf32> to vector<4x128xf32>
    %14 = arith.mulf %12, %13 : vector<4x128xf32>
    %15 = math.absf %14 : vector<4x128xf32>
    %cst = arith.constant 1.000000e+00 : f32
    %16 = vector.broadcast %cst : f32 to vector<4x128xf32>
    %17 = arith.cmpf olt, %15, %16 : vector<4x128xf32>
    %cst_11 = arith.constant 5.000000e-01 : f32
    %18 = vector.broadcast %cst_11 : f32 to vector<4x128xf32>
    %19 = arith.mulf %18, %14 : vector<4x128xf32>
    %20 = arith.mulf %19, %14 : vector<4x128xf32>
    %cst_12 = arith.constant 5.000000e-01 : f32
    %21 = vector.broadcast %cst_12 : f32 to vector<4x128xf32>
    %22 = arith.subf %15, %21 : vector<4x128xf32>
    %23 = arith.select %17, %20, %22 : vector<4x128xi1>, vector<4x128xf32>
    %24 = vector.shape_cast %23 : vector<4x128xf32> to vector<1x4x128xf32>
    %cst_13 = arith.constant dense<0.000000e+00> : vector<1xf32>
    %25 = vector.multi_reduction <add>, %24, %cst_13 [1, 2] : vector<1x4x128xf32> to vector<1xf32>
    %26 = vector.shape_cast %25 : vector<1xf32> to vector<1x1x1xf32>
    %27 = vector.extract %26[0, 0, 0] : f32 from vector<1x1x1xf32>
    %cst_14 = arith.constant dense<0xFF800000> : vector<128xf32>
    %28 = vector.multi_reduction <maximumf>, %5, %cst_14 [0] : vector<8x128xf32> to vector<128xf32>
    %29 = vector.shape_cast %28 : vector<128xf32> to vector<1x128xf32>
    %30 = vector.broadcast %29 : vector<1x128xf32> to vector<8x128xf32>
    %31 = arith.subf %5, %30 : vector<8x128xf32>
    %32 = math.exp %31 : vector<8x128xf32>
    %cst_15 = arith.constant dense<0.000000e+00> : vector<128xf32>
    %33 = vector.multi_reduction <add>, %32, %cst_15 [0] : vector<8x128xf32> to vector<128xf32>
    %34 = vector.shape_cast %33 : vector<128xf32> to vector<1x128xf32>
    %35 = math.log %34 : vector<1x128xf32>
    %36 = arith.addf %35, %29 : vector<1x128xf32>
    %37 = tpu.iota {dimensions = array<i32: 0>} : vector<8x128xi32>
    %38 = vector.broadcast %7 : vector<1x128xi32> to vector<8x128xi32>
    %39 = arith.cmpi eq, %37, %38 : vector<8x128xi32>
    %40 = arith.extui %39 : vector<8x128xi1> to vector<8x128xi32>
    %41 = arith.sitofp %40 : vector<8x128xi32> to vector<8x128xf32>
    %42 = arith.mulf %5, %41 : vector<8x128xf32>
    %cst_16 = arith.constant dense<0.000000e+00> : vector<128xf32>
    %43 = vector.multi_reduction <add>, %42, %cst_16 [0] : vector<8x128xf32> to vector<128xf32>
    %44 = vector.shape_cast %43 : vector<128xf32> to vector<1x128xf32>
    %45 = arith.subf %36, %44 : vector<1x128xf32>
    %46 = tpu.iota {dimensions = array<i32: 1>} : vector<1x128xi32>
    %c64_i32 = arith.constant 64 : i32
    %47 = vector.broadcast %c64_i32 : i32 to vector<1x128xi32>
    %48 = arith.cmpi slt, %46, %47 : vector<1x128xi32>
    %cst_17 = arith.constant dense<true> : vector<1x128xi1>
    %49 = arith.xori %9, %cst_17 : vector<1x128xi1>
    %50 = arith.andi %48, %49 : vector<1x128xi1>
    %cst_18 = arith.constant 0.000000e+00 : f32
    %51 = vector.broadcast %cst_18 : f32 to vector<1x128xf32>
    %52 = arith.select %50, %45, %51 : vector<1x128xi1>, vector<1x128xf32>
    %53 = math.absf %52 : vector<1x128xf32>
    %54 = vector.shape_cast %11 : vector<1x128xf32> to vector<1x1x128xf32>
    %cst_19 = arith.constant dense<0.000000e+00> : vector<1xf32>
    %55 = vector.multi_reduction <add>, %54, %cst_19 [1, 2] : vector<1x1x128xf32> to vector<1xf32>
    %56 = vector.shape_cast %55 : vector<1xf32> to vector<1x1x1xf32>
    %57 = vector.extract %56[0, 0, 0] : f32 from vector<1x1x1xf32>
    %58 = arith.fptosi %57 : f32 to i32
    %c3_i32 = arith.constant 3 : i32
    %59 = arith.muli %c3_i32, %58 : i32
    %c63_i32 = arith.constant 63 : i32
    %60 = arith.minsi %59, %c63_i32 : i32
    %61 = arith.mulf %45, %11 : vector<1x128xf32>
    %62 = vector.shape_cast %61 : vector<1x128xf32> to vector<1x1x128xf32>
    %cst_20 = arith.constant dense<0.000000e+00> : vector<1xf32>
    %63 = vector.multi_reduction <add>, %62, %cst_20 [1, 2] : vector<1x1x128xf32> to vector<1xf32>
    %64 = vector.shape_cast %63 : vector<1xf32> to vector<1x1x1xf32>
    %65 = vector.extract %64[0, 0, 0] : f32 from vector<1x1x1xf32>
    %66 = tpu.bitcast %53 : vector<1x128xf32> -> vector<1x128xi32>
    %c0_i32_21 = arith.constant 0 : i32
    %c2147483646_i32 = arith.constant 2147483646 : i32
    %c0_i32_22 = arith.constant 0 : i32
    %c31_i32 = arith.constant 31 : i32
    %67 = arith.addi %c0_i32_22, %c31_i32 : i32
    %c1_i32 = arith.constant 1 : i32
    %68:2 = scf.for %arg6 = %c0_i32_22 to %67 step %c1_i32 iter_args(%arg7 = %c0_i32_21, %arg8 = %c2147483646_i32) -> (i32, i32)  : i32 {
      %114 = arith.subi %arg8, %arg7 : i32
      %c1_i32_35 = arith.constant 1 : i32
      %115 = arith.addi %114, %c1_i32_35 : i32
      %c1_i32_36 = arith.constant 1 : i32
      %116 = arith.shrsi %115, %c1_i32_36 : i32
      %117 = arith.addi %arg7, %116 : i32
      %118 = vector.broadcast %117 : i32 to vector<1x128xi32>
      %119 = arith.cmpi sge, %66, %118 : vector<1x128xi32>
      %120 = arith.extui %119 : vector<1x128xi1> to vector<1x128xi32>
      %121 = vector.shape_cast %120 : vector<1x128xi32> to vector<1x1x128xi32>
      %cst_37 = arith.constant dense<0> : vector<1xi32>
      %122 = vector.multi_reduction <add>, %121, %cst_37 [1, 2] : vector<1x1x128xi32> to vector<1xi32>
      %123 = vector.shape_cast %122 : vector<1xi32> to vector<1x1x1xi32>
      %124 = vector.extract %123[0, 0, 0] : i32 from vector<1x1x1xi32>
      %125 = arith.cmpi sge, %124, %60 : i32
      %126 = arith.select %125, %117, %arg7 : i32
      %c1_i32_38 = arith.constant 1 : i32
      %127 = arith.subi %117, %c1_i32_38 : i32
      %128 = arith.select %125, %arg8, %127 : i32
      scf.yield %126, %128 : i32, i32
    }
    %69 = vector.broadcast %68#0 : i32 to vector<1x128xi32>
    %70 = arith.cmpi eq, %66, %69 : vector<1x128xi32>
    %cst_23 = arith.constant 0.000000e+00 : f32
    %71 = vector.broadcast %cst_23 : f32 to vector<1x128xf32>
    %72 = arith.select %70, %53, %71 : vector<1x128xi1>, vector<1x128xf32>
    %73 = vector.shape_cast %72 : vector<1x128xf32> to vector<1x1x128xf32>
    %cst_24 = arith.constant dense<0xFF800000> : vector<1xf32>
    %74 = vector.multi_reduction <maximumf>, %73, %cst_24 [1, 2] : vector<1x1x128xf32> to vector<1xf32>
    %75 = vector.shape_cast %74 : vector<1xf32> to vector<1x1x1xf32>
    %76 = vector.extract %75[0, 0, 0] : f32 from vector<1x1x1xf32>
    %77 = vector.broadcast %76 : f32 to vector<1x128xf32>
    %78 = arith.cmpf ogt, %53, %77 : vector<1x128xf32>
    %79 = arith.extui %78 : vector<1x128xi1> to vector<1x128xi32>
    %80 = arith.sitofp %79 : vector<1x128xi32> to vector<1x128xf32>
    %81 = vector.shape_cast %80 : vector<1x128xf32> to vector<1x1x128xf32>
    %cst_25 = arith.constant dense<0.000000e+00> : vector<1xf32>
    %82 = vector.multi_reduction <add>, %81, %cst_25 [1, 2] : vector<1x1x128xf32> to vector<1xf32>
    %83 = vector.shape_cast %82 : vector<1xf32> to vector<1x1x1xf32>
    %84 = vector.extract %83[0, 0, 0] : f32 from vector<1x1x1xf32>
    %85 = arith.mulf %53, %80 : vector<1x128xf32>
    %86 = vector.shape_cast %85 : vector<1x128xf32> to vector<1x1x128xf32>
    %cst_26 = arith.constant dense<0.000000e+00> : vector<1xf32>
    %87 = vector.multi_reduction <add>, %86, %cst_26 [1, 2] : vector<1x1x128xf32> to vector<1xf32>
    %88 = vector.shape_cast %87 : vector<1xf32> to vector<1x1x1xf32>
    %89 = vector.extract %88[0, 0, 0] : f32 from vector<1x1x1xf32>
    %90 = arith.sitofp %60 : i32 to f32
    %91 = arith.subf %90, %84 : f32
    %92 = arith.mulf %91, %76 : f32
    %93 = arith.addf %89, %92 : f32
    %c0_i32_27 = arith.constant 0 : i32
    %94 = arith.cmpi sgt, %60, %c0_i32_27 : i32
    %cst_28 = arith.constant 0.000000e+00 : f32
    %95 = arith.select %94, %93, %cst_28 : f32
    %96 = arith.addf %65, %95 : f32
    %97 = tpu.iota {dimensions = array<i32: 0>} : vector<8x128xi32>
    %c0_i32_29 = arith.constant 0 : i32
    %98 = vector.broadcast %c0_i32_29 : i32 to vector<8x128xi32>
    %99 = arith.cmpi eq, %97, %98 : vector<8x128xi32>
    %c1_i32_30 = arith.constant 1 : i32
    %100 = vector.broadcast %c1_i32_30 : i32 to vector<8x128xi32>
    %101 = arith.cmpi eq, %97, %100 : vector<8x128xi32>
    %c2_i32 = arith.constant 2 : i32
    %102 = vector.broadcast %c2_i32 : i32 to vector<8x128xi32>
    %103 = arith.cmpi eq, %97, %102 : vector<8x128xi32>
    %cst_31 = arith.constant 0.000000e+00 : f32
    %104 = vector.broadcast %57 : f32 to vector<8x128xf32>
    %105 = vector.broadcast %cst_31 : f32 to vector<8x128xf32>
    %106 = arith.select %103, %104, %105 : vector<8x128xi1>, vector<8x128xf32>
    %107 = vector.broadcast %96 : f32 to vector<8x128xf32>
    %108 = arith.select %101, %107, %106 : vector<8x128xi1>, vector<8x128xf32>
    %109 = vector.broadcast %27 : f32 to vector<8x128xf32>
    %110 = arith.select %99, %109, %108 : vector<8x128xi1>, vector<8x128xf32>
    %c0_32 = arith.constant 0 : index
    %c0_33 = arith.constant 0 : index
    %c0_34 = arith.constant 0 : index
    %111 = vector.load %arg5[%c0_32, %c0_33, %c0_34] : memref<1x8x128xf32, #tpu.memory_space<vmem>>, vector<1x8x128xf32>
    %112 = vector.shape_cast %111 : vector<1x8x128xf32> to vector<8x128xf32>
    %113 = vector.shape_cast %110 : vector<8x128xf32> to vector<1x8x128xf32>
    tpu.vector_store %arg5[%c0_32, %c0_33, %c0_34], %113 {strides = array<i32>} : memref<1x8x128xf32, #tpu.memory_space<vmem>>, vector<1x8x128xf32>,
    return
  }
  func.func @transform_0(%arg0: i32) -> (i32, i32, i32) {
    %c0_i32 = arith.constant 0 : i32
    %c0_i32_0 = arith.constant 0 : i32
    %c0_i32_1 = arith.constant 0 : i32
    return %arg0, %c0_i32, %c0_i32_0 : i32, i32, i32
  }
  func.func @transform_1(%arg0: i32) -> (i32, i32, i32) {
    %c0_i32 = arith.constant 0 : i32
    %c0_i32_0 = arith.constant 0 : i32
    %c0_i32_1 = arith.constant 0 : i32
    return %arg0, %c0_i32, %c0_i32_0 : i32, i32, i32
  }
  func.func @transform_2(%arg0: i32) -> (i32, i32, i32) {
    %c0_i32 = arith.constant 0 : i32
    %c0_i32_0 = arith.constant 0 : i32
    %c0_i32_1 = arith.constant 0 : i32
    return %arg0, %c0_i32, %c0_i32_0 : i32, i32, i32
  }
  func.func @transform_3(%arg0: i32) -> (i32, i32, i32) {
    %c0_i32 = arith.constant 0 : i32
    %c0_i32_0 = arith.constant 0 : i32
    %c0_i32_1 = arith.constant 0 : i32
    return %arg0, %c0_i32, %c0_i32_0 : i32, i32, i32
  }
  func.func @transform_4(%arg0: i32) -> (i32, i32, i32) {
    %c0_i32 = arith.constant 0 : i32
    %c0_i32_0 = arith.constant 0 : i32
    %c0_i32_1 = arith.constant 0 : i32
    return %arg0, %c0_i32, %c0_i32_0 : i32, i32, i32
  }
}

</mosaic_0001>

<llo_original>
// kernel: tpu_custom_call.1
$region0: #{tpu_custom_call.1}
  #allocation0 [shape = 'u32[]', space=smem, size = 0x4, offset = 0x4, fixed_abs, tag = 'smem constant byte address 0x4 - core index']
  #allocation1 [shape = 'u32[144,128]{1,0:T(1,128)}', space=vmem, size = 0x12000, scoped, tag = 'internal scratch']
  %s0 = inlined_call_operand.hbm [shape: f32[2,4,128], index: 0, kind: input, shape index: {}]
  %s1 = inlined_call_operand.hbm [shape: f32[2,4,128], index: 1, kind: input, shape index: {}]
  %s2 = inlined_call_operand.hbm [shape: f32[2,8,128], index: 2, kind: input, shape index: {}]
  %s3 = inlined_call_operand.vmem [shape: s32[2,1,128], index: 3, kind: input, shape index: {}]
  %s4 = inlined_call_operand.hbm [shape: f32[2,8,128], index: 4, kind: output, shape index: {}]
  %s5 = sld [smem:[#allocation0]]
  $region68: #{tpu_custom_call.1} parent=0
    _
  %s7 = ssub.s32 1, %s5
  %s8 = scalar_select 0, %s7, %s5
  $region1: #{tpu_custom_call.1} parent=0
    #allocation2 [shape = 'u8[4096]{0}', space=vmem, size = 0x1000, scoped, tag = 'input window, operand 0']
    #allocation3 [shape = 's32[2]{0}', space=sflag, size = 0x8, scoped, tag = 'scoped memory for tpu_custom_call.1']
    #allocation4 [shape = 's32[2]{0}', space=sflag, size = 0x8, scoped, tag = 'scoped memory for tpu_custom_call.1']
    #allocation5 [shape = 'u8[4096]{0}', space=vmem, size = 0x1000, scoped, tag = 'input window, operand 1']
    #allocation6 [shape = 's32[2]{0}', space=sflag, size = 0x8, scoped, tag = 'scoped memory for tpu_custom_call.1']
    #allocation7 [shape = 'u8[8192]{0}', space=vmem, size = 0x2000, scoped, tag = 'input window, operand 2']
    #allocation8 [shape = 'u8[8192]{0}', space=vmem, size = 0x2000, scoped, tag = 'output window, operand 0']
    %9 = vsyncpa [#allocation3], 0
    %s10 = scalar_lea.sflag [#allocation3], 1
    %11 = vsyncpa %s10, 0
    %12 = vsyncpa [#allocation6], 0
    %s13 = scalar_lea.sflag [#allocation6], 1
    %14 = vsyncpa %s13, 0
    %15 = vsyncpa [#allocation4], 0
    %s16 = scalar_lea.sflag [#allocation4], 1
    %17 = vsyncpa %s16, 0
    loop: start=0, step=1, limit=4
    $region2: #{tpu_custom_call.1} parent=1 // loop_pre_header
      _
    $region3: #{tpu_custom_call.1} parent=1 // loop_header
      %s19 = sphi 0, %s23
      %p20 = scmp.ge.s32.totalorder %s19, 4
      %s29 = sphi 0, %s31
      %s32 = sphi 0, %s29
      %s33 = sphi 0, %s32
      %s49 = sphi 0, %s33
      %s55 = sphi 0, %s57
      %s58 = sphi 0, %s55
      %s59 = sphi 0, %s58
      %s75 = sphi 0, %s59
      %s81 = sphi 0, %s83
      %s84 = sphi 0, %s81
      %s85 = sphi 0, %s84
      %s101 = sphi 0, %s85
      %s107 = sphi 0, %s109
      %s110 = sphi 0, %s107
      %s111 = sphi 0, %s110
      %s127 = sphi 0, %s111
      %s133 = sphi 0, %s135
      %s136 = sphi 0, %s133
      %s137 = sphi 0, %s136
      %s153 = sphi 0, %s137
    $region4: #{tpu_custom_call.1} parent=1 // loop_header_branch
      %22 = sbr.rel (%p20) target = $region8
    $region5: #{tpu_custom_call.1} parent=1 // loop_body
      %s24 = ssub.s32 %s19, 1
      %s25 = ssub.s32 %s19, 2
      %s26 = sadd.s32 %s19, 1
      %s27 = ssub.s32 %s19, %s26
      %p28 = scmp.eq.s32.totalorder %s27, 0
      %s30 = sadd.s32 %s29, 1
      %s31 = scalar_select %p28, %s29, %s30
      %p34 = pneg %p28
      %p35 = scmp.eq.s32.totalorder %s19, 1
      %p36 = por %p34, %p35
      %p37 = scmp.ne.s32.totalorder %s29, %s32
      %p38 = scmp.eq.s32.totalorder %s19, 0
      %p39 = por %p37, %p38
      %p40 = scmp.ne.s32.totalorder %s29, %s32
      %p41 = scmp.eq.s32.totalorder %s24, 1
      %p42 = por %p40, %p41
      %p43 = scmp.ne.s32.totalorder %s32, %s33
      %p44 = scmp.eq.s32.totalorder %s24, 0
      %p45 = por %p43, %p44
      %p46 = scmp.ne.s32.totalorder %s32, %s33
      %p47 = scmp.eq.s32.totalorder %s25, 1
      %p48 = por %p46, %p47
      %p50 = scmp.ne.s32.totalorder %s33, %s49
      %p51 = scmp.eq.s32.totalorder %s25, 0
      %p52 = por %p50, %p51
      %s53 = ssub.s32 %s19, %s26
      %p54 = scmp.eq.s32.totalorder %s53, 0
      %s56 = sadd.s32 %s55, 1
      %s57 = scalar_select %p54, %s55, %s56
      %p60 = pneg %p54
      %p61 = scmp.eq.s32.totalorder %s19, 1
      %p62 = por %p60, %p61
      %p63 = scmp.ne.s32.totalorder %s55, %s58
      %p64 = scmp.eq.s32.totalorder %s19, 0
      %p65 = por %p63, %p64
      %p66 = scmp.ne.s32.totalorder %s55, %s58
      %p67 = scmp.eq.s32.totalorder %s24, 1
      %p68 = por %p66, %p67
      %p69 = scmp.ne.s32.totalorder %s58, %s59
      %p70 = scmp.eq.s32.totalorder %s24, 0
      %p71 = por %p69, %p70
      %p72 = scmp.ne.s32.totalorder %s58, %s59
      %p73 = scmp.eq.s32.totalorder %s25, 1
      %p74 = por %p72, %p73
      %p76 = scmp.ne.s32.totalorder %s59, %s75
      %p77 = scmp.eq.s32.totalorder %s25, 0
      %p78 = por %p76, %p77
      %s79 = ssub.s32 %s19, %s26
      %p80 = scmp.eq.s32.totalorder %s79, 0
      %s82 = sadd.s32 %s81, 1
      %s83 = scalar_select %p80, %s81, %s82
      %p86 = pneg %p80
      %p87 = scmp.eq.s32.totalorder %s19, 1
      %p88 = por %p86, %p87
      %p89 = scmp.ne.s32.totalorder %s81, %s84
      %p90 = scmp.eq.s32.totalorder %s19, 0
      %p91 = por %p89, %p90
      %p92 = scmp.ne.s32.totalorder %s81, %s84
      %p93 = scmp.eq.s32.totalorder %s24, 1
      %p94 = por %p92, %p93
      %p95 = scmp.ne.s32.totalorder %s84, %s85
      %p96 = scmp.eq.s32.totalorder %s24, 0
      %p97 = por %p95, %p96
      %p98 = scmp.ne.s32.totalorder %s84, %s85
      %p99 = scmp.eq.s32.totalorder %s25, 1
      %p100 = por %p98, %p99
      %p102 = scmp.ne.s32.totalorder %s85, %s101
      %p103 = scmp.eq.s32.totalorder %s25, 0
      %p104 = por %p102, %p103
      %s105 = ssub.s32 %s19, %s26
      %p106 = scmp.eq.s32.totalorder %s105, 0
      %s108 = sadd.s32 %s107, 1
      %s109 = scalar_select %p106, %s107, %s108
      %p112 = pneg %p106
      %p113 = scmp.eq.s32.totalorder %s19, 1
      %p114 = por %p112, %p113
      %p115 = scmp.ne.s32.totalorder %s107, %s110
      %p116 = scmp.eq.s32.totalorder %s19, 0
      %p117 = por %p115, %p116
      %p118 = scmp.ne.s32.totalorder %s107, %s110
      %p119 = scmp.eq.s32.totalorder %s24, 1
      %p120 = por %p118, %p119
      %p121 = scmp.ne.s32.totalorder %s110, %s111
      %p122 = scmp.eq.s32.totalorder %s24, 0
      %p123 = por %p121, %p122
      %p124 = scmp.ne.s32.totalorder %s110, %s111
      %p125 = scmp.eq.s32.totalorder %s25, 1
      %p126 = por %p124, %p125
      %p128 = scmp.ne.s32.totalorder %s111, %s127
      %p129 = scmp.eq.s32.totalorder %s25, 0
      %p130 = por %p128, %p129
      %s131 = ssub.s32 %s19, %s26
      %p132 = scmp.eq.s32.totalorder %s131, 0
      %s134 = sadd.s32 %s133, 1
      %s135 = scalar_select %p132, %s133, %s134
      %p138 = pneg %p132
      %p139 = scmp.eq.s32.totalorder %s19, 1
      %p140 = por %p138, %p139
      %p141 = scmp.ne.s32.totalorder %s133, %s136
      %p142 = scmp.eq.s32.totalorder %s19, 0
      %p143 = por %p141, %p142
      %p144 = scmp.ne.s32.totalorder %s133, %s136
      %p145 = scmp.eq.s32.totalorder %s24, 1
      %p146 = por %p144, %p145
      %p147 = scmp.ne.s32.totalorder %s136, %s137
      %p148 = scmp.eq.s32.totalorder %s24, 0
      %p149 = por %p147, %p148
      %p150 = scmp.ne.s32.totalorder %s136, %s137
      %p151 = scmp.eq.s32.totalorder %s25, 1
      %p152 = por %p150, %p151
      %p154 = scmp.ne.s32.totalorder %s137, %s153
      %p155 = scmp.eq.s32.totalorder %s25, 0
      %p156 = por %p154, %p155
      %p157 = scmp.le.s32.totalorder 1, %s19
      %p158 = scmp.lt.s32.totalorder %s19, 3
      %p159 = pnand %p157, %p158
      %p160 = pneg %p159
      // Predicated region
      $region9: #{tpu_custom_call.1} parent=5 // pred_check
        _
      $region10: #{tpu_custom_call.1} parent=5 // pred_check_branch
        %162 = sbr.rel (%p159) target = $region12
      $region11: #{tpu_custom_call.1} parent=5 // pred_region
        %s163 = ssub.s32 %s19, 1
      $region12: #{tpu_custom_call.1} parent=5 // pred_fallthru
        _
      %p164 = scmp.lt.s32.totalorder %s19, 2
      // Predicated region
      $region13: #{tpu_custom_call.1} parent=5 // pred_check
        %p165 = pneg %p164
      $region14: #{tpu_custom_call.1} parent=5 // pred_check_branch
        %167 = sbr.rel (%p165) target = $region16
      $region15: #{tpu_custom_call.1} parent=5 // pred_region
        // Predicated region
        $region17: #{tpu_custom_call.1} parent=15 // pred_check
          %p168 = pneg %p39
        $region18: #{tpu_custom_call.1} parent=15 // pred_check_branch
          %170 = sbr.rel (%p168) target = $region20
        $region19: #{tpu_custom_call.1} parent=15 // pred_region
          %s171 = sand.u32 %s29, 1
          %s172 = scalar_lea.sflag [#allocation3], %s171
          %s173 = sand.u32 %s29, 1
          %s174 = smul.addr %s173, 4
          %s175 = scalar_lea.vmem [#allocation2], %s174
          %s177 = ssub.s32 64, 64
          %178 = vsyncadd %s172, %s177
          %s179 = smul.addr %s19, 64
          %s180 = scalar_lea.hbm %s0, %s179
          %s182 = sshll.u32 %s175, 4
          %s183 = int_to_ptr.vmem [resolvable:$true] %s182
          %185 = dma.hbm_to_vmem [thread:$0]  %s180, 64, %s183, %s172
        $region20: #{tpu_custom_call.1} parent=15 // pred_fallthru
          _
        // Predicated region
        $region21: #{tpu_custom_call.1} parent=15 // pred_check
          %p186 = pneg %p65
        $region22: #{tpu_custom_call.1} parent=15 // pred_check_branch
          %188 = sbr.rel (%p186) target = $region24
        $region23: #{tpu_custom_call.1} parent=15 // pred_region
          %s189 = sand.u32 %s19, 1
          %s190 = scalar_lea.sflag [#allocation6], %s189
          %s191 = sand.u32 %s55, 1
          %s192 = smul.addr %s191, 4
          %s193 = scalar_lea.vmem [#allocation5], %s192
          %s195 = ssub.s32 64, 64
          %196 = vsyncadd %s190, %s195
          %s197 = smul.addr %s19, 64
          %s198 = scalar_lea.hbm %s1, %s197
          %s200 = sshll.u32 %s193, 4
          %s201 = int_to_ptr.vmem [resolvable:$true] %s200
          %203 = dma.hbm_to_vmem [thread:$0]  %s198, 64, %s201, %s190
        $region24: #{tpu_custom_call.1} parent=15 // pred_fallthru
          _
        // Predicated region
        $region25: #{tpu_custom_call.1} parent=15 // pred_check
          %p204 = pneg %p91
        $region26: #{tpu_custom_call.1} parent=15 // pred_check_branch
          %206 = sbr.rel (%p204) target = $region28
        $region27: #{tpu_custom_call.1} parent=15 // pred_region
          %s207 = sand.u32 %s19, 1
          %s208 = scalar_lea.sflag [#allocation6], %s207
          %s209 = sand.u32 %s81, 1
          %s210 = smul.addr %s209, 8
          %s211 = scalar_lea.vmem [#allocation7], %s210
          %s213 = ssub.s32 128, 128
          %214 = vsyncadd %s208, %s213
          %s215 = smul.addr %s19, 128
          %s216 = scalar_lea.hbm %s2, %s215
          %s218 = sshll.u32 %s211, 4
          %s219 = int_to_ptr.vmem [resolvable:$true] %s218
          %221 = dma.hbm_to_vmem [thread:$0]  %s216, 128, %s219, %s208
        $region28: #{tpu_custom_call.1} parent=15 // pred_fallthru
          _
        // Predicated region
        $region29: #{tpu_custom_call.1} parent=15 // pred_check
          %p222 = pneg %p117
        $region30: #{tpu_custom_call.1} parent=15 // pred_check_branch
          %224 = sbr.rel (%p222) target = $region32
        $region31: #{tpu_custom_call.1} parent=15 // pred_region
          %p225 = scmp.lt.s32.totalorder %s19, 1
          %s226 = scalar_select %p225, %s19, 1
          %s227 = scalar_lea.vmem %s3, %s226
        $region32: #{tpu_custom_call.1} parent=15 // pred_fallthru
          _
      $region16: #{tpu_custom_call.1} parent=5 // pred_fallthru
        _
      %p228 = scmp.le.s32.totalorder 1, %s19
      %p229 = scmp.lt.s32.totalorder %s19, 3
      %p230 = pnand %p228, %p229
      %p231 = pneg %p230
      // Predicated region
      $region33: #{tpu_custom_call.1} parent=5 // pred_check
        _
      $region34: #{tpu_custom_call.1} parent=5 // pred_check_branch
        %233 = sbr.rel (%p230) target = $region36
      $region35: #{tpu_custom_call.1} parent=5 // pred_region
        %s234 = ssub.s32 %s19, 1
        %s235 = sand.u32 %s32, 1
        %s236 = scalar_lea.sflag [#allocation3], %s235
        %s237 = sand.u32 %s32, 1
        %s238 = smul.addr %s237, 4
        %s239 = scalar_lea.vmem [#allocation2], %s238
        // Predicated region
        $region37: #{tpu_custom_call.1} parent=35 // pred_check
          %p240 = pneg %p45
        $region38: #{tpu_custom_call.1} parent=35 // pred_check_branch
          %242 = sbr.rel (%p240) target = $region40
        $region39: #{tpu_custom_call.1} parent=35 // pred_region
          %243 = dma.done %s236, 64
        $region40: #{tpu_custom_call.1} parent=35 // pred_fallthru
          _
        %s244 = sand.u32 %s24, 1
        %s245 = scalar_lea.sflag [#allocation6], %s244
        %s246 = sand.u32 %s58, 1
        %s247 = smul.addr %s246, 4
        %s248 = scalar_lea.vmem [#allocation5], %s247
        // Predicated region
        $region41: #{tpu_custom_call.1} parent=35 // pred_check
          %p249 = pneg %p71
        $region42: #{tpu_custom_call.1} parent=35 // pred_check_branch
          %251 = sbr.rel (%p249) target = $region44
        $region43: #{tpu_custom_call.1} parent=35 // pred_region
          %252 = dma.done %s245, 64
        $region44: #{tpu_custom_call.1} parent=35 // pred_fallthru
          _
        %s253 = sand.u32 %s24, 1
        %s254 = scalar_lea.sflag [#allocation6], %s253
        %s255 = sand.u32 %s84, 1
        %s256 = smul.addr %s255, 8
        %s257 = scalar_lea.vmem [#allocation7], %s256
        // Predicated region
        $region45: #{tpu_custom_call.1} parent=35 // pred_check
          %p258 = pneg %p97
        $region46: #{tpu_custom_call.1} parent=35 // pred_check_branch
          %260 = sbr.rel (%p258) target = $region48
        $region47: #{tpu_custom_call.1} parent=35 // pred_region
          %261 = dma.done %s254, 128
        $region48: #{tpu_custom_call.1} parent=35 // pred_fallthru
          _
        %s262 = sand.u32 %s32, 1
        %s263 = scalar_lea.sflag [#allocation3], %s262
        %s264 = sand.u32 %s32, 1
        %s265 = smul.addr %s264, 4
        %s266 = scalar_lea.vmem [#allocation2], %s265
        %p267 = pneg %p45
        %p268 = pneg %p42
        %s269 = sand.u32 %s24, 1
        %s270 = scalar_lea.sflag [#allocation6], %s269
        %s271 = sand.u32 %s58, 1
        %s272 = smul.addr %s271, 4
        %s273 = scalar_lea.vmem [#allocation5], %s272
        %p274 = pneg %p71
        %p275 = pneg %p68
        %s276 = sand.u32 %s24, 1
        %s277 = scalar_lea.sflag [#allocation6], %s276
        %s278 = sand.u32 %s84, 1
        %s279 = smul.addr %s278, 8
        %s280 = scalar_lea.vmem [#allocation7], %s279
        %p281 = pneg %p97
        %p282 = pneg %p94
        %p283 = scmp.lt.s32.totalorder %s24, 1
        %s284 = scalar_select %p283, %s24, 1
        %s285 = scalar_lea.vmem %s3, %s284
        %p286 = pneg %p123
        %p287 = pneg %p120
        %p288 = pneg %p149
        %p289 = pneg %p146
        %s290 = sand.u32 %s136, 1
        %s291 = scalar_lea.sflag [#allocation4], %s290
        %s292 = sand.u32 %s136, 1
        %s293 = smul.addr %s292, 8
        %s294 = scalar_lea.vmem [#allocation8], %s293
        %p295 = scmp.lt.s32.totalorder %s24, 1
        %s296 = scalar_select %p295, %s24, 1
        %s297 = scalar_lea.vmem %s3, %s296
        %v298 = vld [vmem:[%s239] sm:$0xf]
        %v299 = vld [vmem:[%s248] sm:$0xf]
        %v300 = vld [vmem:[%s257] sm:$0xff]
        %v301 = vld [vmem:[%s297] sm:$0x1]
        %vm302 = vcmp.gt.s32.totalorder %v301, 0
        %v303 = vsel %vm302, 1, 0
        %v304 = vcvt.s32.f32 %v303
        %v305 = vsub.f32 %v298, %v299
        %v307 = vlaneseq
        %v308 = vshrl.u32 %v307, 7
        %v309 = vsub.s32 0, %v308
        %v310 = vrot.slane %v304, %v309
        %v312 = vmul.f32 %v305, %v310
        %v313 = vand.u32 2147483647, %v312
        %vm314 = vcmp.lt.f32.partialorder %v313, 1.0
        %v315 = vmul.f32 %v312, 0.5
        %v316 = vmul.f32 %v315, %v312
        %v317 = vsub.f32 %v313, 0.5
        %v318 = vsel %vm314, %v316, %v317
        %vm319 = vcmask 1043456
        %v320 = vsel %vm319, %v318, 0.0
        %321 = vadd.xlane.f32.xlu0 %v320
        %v322 = vpop.xlane.xlu0 %321
        %v323 = vrot.slane %v322, 4
        %v324 = vadd.f32 %v322, %v323
        %v325 = vrot.slane %v324, 2
        %v326 = vadd.f32 %v324, %v325
        %v327 = vrot.slane %v326, 1
        %v328 = vadd.f32 %v326, %v327
        %s329 = vtos %v328
        %v330 = vrot.slane %v300, 4
        %v331 = vmax.f32 %v300, %v330
        %v332 = vrot.slane %v331, 2
        %v333 = vmax.f32 %v331, %v332
        %v334 = vrot.slane %v333, 1
        %v335 = vmax.f32 %v333, %v334
        %v336 = vsub.f32 %v300, %v335
        %v337 = vmul.f32 %v336, 1.442695
        %v338 = vpow.pop %v337
        %v339 = vrot.slane %v338, 4
        %v340 = vadd.f32 %v338, %v339
        %v341 = vrot.slane %v340, 2
        %v342 = vadd.f32 %v340, %v341
        %v343 = vrot.slane %v342, 1
        %v344 = vadd.f32 %v342, %v343
        %v345 = vlog2.pop %v344
        %v346 = vmul.f32 %v345, 0.6931472
        %v347 = vadd.f32 %v346, %v335
        %v348 = vlaneseq
        %v349 = vshrl.u32 %v348, 7
        %v350 = vlaneseq
        %v351 = vshrl.u32 %v350, 7
        %v352 = vsub.s32 0, %v351
        %v353 = vrot.slane %v301, %v352
        %vm354 = vcmp.eq.s32.totalorder %v349, %v353
        %v355 = vsel %vm354, 1, 0
        %v356 = vcvt.s32.f32 %v355
        %v357 = vmul.f32 %v300, %v356
        %v358 = vrot.slane %v357, 4
        %v359 = vadd.f32 %v357, %v358
        %v360 = vrot.slane %v359, 2
        %v361 = vadd.f32 %v359, %v360
        %v362 = vrot.slane %v361, 1
        %v363 = vadd.f32 %v361, %v362
        %v364 = vsub.f32 %v347, %v363
        %v365 = vlaneseq
        %v366 = vand.u32 %v365, 127
        %vm367 = vcmp.lt.s32.totalorder %v366, 64
        %vm368 = vmxor %vm302, 1
        %vm369 = vmand %vm367, %vm368
        %v370 = vsel %vm369, %v364, 0.0
        %v371 = vand.u32 2147483647, %v370
        %vm372 = vcmask 1040384
        %v373 = vsel %vm372, %v304, 0.0
        %374 = vadd.xlane.f32.xlu0 %v373
        %v375 = vpop.xlane.xlu0 %374
        %v376 = vrot.slane %v375, 4
        %v377 = vadd.f32 %v375, %v376
        %v378 = vrot.slane %v377, 2
        %v379 = vadd.f32 %v377, %v378
        %v380 = vrot.slane %v379, 1
        %v381 = vadd.f32 %v379, %v380
        %s382 = vtos %v381
        %s383 = scvt.f32.s32.to.zero.pseudo %s382
        %s384 = smul.u32 %s383, 3
        %p385 = scmp.lt.s32.totalorder %s384, 63
        %s386 = scalar_select %p385, %s384, 63
        %v387 = vmul.f32 %v364, %v304
        %v388 = vsel %vm372, %v387, 0.0
        %389 = vadd.xlane.f32.xlu0 %v388
        %v390 = vpop.xlane.xlu0 %389
        %v391 = vrot.slane %v390, 4
        %v392 = vadd.f32 %v390, %v391
        %v393 = vrot.slane %v392, 2
        %v394 = vadd.f32 %v392, %v393
        %v395 = vrot.slane %v394, 1
        %v396 = vadd.f32 %v394, %v395
        %s397 = vtos %v396
        loop: start=0, step=1, limit=31
        $region49: #{tpu_custom_call.1} parent=35 // loop_pre_header
          _
        $region50: #{tpu_custom_call.1} parent=35 // loop_header
          %s400 = sphi 0, %s404
          %p401 = scmp.ge.s32.totalorder %s400, 31
          %s405 = sphi 0, %s435
          %s406 = sphi 2147483646, %s437
        $region51: #{tpu_custom_call.1} parent=35 // loop_header_branch
          %403 = sbr.rel (%p401) target = $region55
        $region52: #{tpu_custom_call.1} parent=35 // loop_body
          %s407 = ssub.s32 %s406, %s405
          %s408 = sadd.s32 %s407, 1
          %s409 = sshra.s32 %s408, 1
          %s410 = sadd.s32 %s405, %s409
          %v411 = vstv %s410
          %vm412 = vcmp.ge.s32.totalorder %v371, %v411
          %v413 = vsel %vm412, 1, 0
          %v414 = vsel %vm372, %v413, 0
          %v415 = vand.u32 %v414, 65535
          %v416 = vshrl.u32 %v414, 16
          %v417 = vcvt.s32.f32 %v415
          %v418 = vcvt.s32.f32 %v416
          %419 = vadd.xlane.f32.xlu0 %v417
          %v420 = vpop.xlane.xlu0 %419
          %421 = vadd.xlane.f32.xlu0 %v418
          %v422 = vpop.xlane.xlu0 %421
          %v423 = vcvt.f32.s32 %v420
          %v424 = vcvt.f32.s32 %v422
          %v425 = vshll.u32 %v424, 16
          %v426 = vadd.s32 %v425, %v423
          %v427 = vrot.slane %v426, 4
          %v428 = vadd.s32 %v426, %v427
          %v429 = vrot.slane %v428, 2
          %v430 = vadd.s32 %v428, %v429
          %v431 = vrot.slane %v430, 1
          %v432 = vadd.s32 %v430, %v431
          %s433 = vtos %v432
          %p434 = scmp.ge.s32.totalorder %s433, %s386
          %s435 = scalar_select %p434, %s410, %s405
          %s436 = ssub.s32 %s410, 1
          %s437 = scalar_select %p434, %s406, %s436
        $region53: #{tpu_custom_call.1} parent=35 // loop_footer
          %s404 = sadd.s32 1, %s400
        $region54: #{tpu_custom_call.1} parent=35 // loop_footer_branch
          %399 = sbr.rel target = $region50
        $region55: #{tpu_custom_call.1} parent=35 // loop_exit
          _
        %v438 = vstv %s405
        %vm439 = vcmp.eq.s32.totalorder %v371, %v438
        %v440 = vsel %vm439, %v371, 0.0
        %v441 = vsel %vm372, %v440, -inf
        %442 = vmax.xlane.f32.xlu0 %v441
        %v443 = vpop.xlane.xlu0 %442
        %v444 = vrot.slane %v443, 4
        %v445 = vmax.f32 %v443, %v444
        %v446 = vrot.slane %v445, 2
        %v447 = vmax.f32 %v445, %v446
        %v448 = vrot.slane %v447, 1
        %v449 = vmax.f32 %v447, %v448
        %s450 = vtos %v449
        %v451 = vstv %s450
        %vm452 = vcmp.gt.f32.partialorder %v371, %v451
        %v453 = vsel %vm452, 1, 0
        %v454 = vcvt.s32.f32 %v453
        %v455 = vsel %vm372, %v454, 0.0
        %456 = vadd.xlane.f32.xlu0 %v455
        %v457 = vpop.xlane.xlu0 %456
        %v458 = vrot.slane %v457, 4
        %v459 = vadd.f32 %v457, %v458
        %v460 = vrot.slane %v459, 2
        %v461 = vadd.f32 %v459, %v460
        %v462 = vrot.slane %v461, 1
        %v463 = vadd.f32 %v461, %v462
        %s464 = vtos %v463
        %v465 = vmul.f32 %v371, %v454
        %v466 = vsel %vm372, %v465, 0.0
        %467 = vadd.xlane.f32.xlu0 %v466
        %v468 = vpop.xlane.xlu0 %467
        %v469 = vrot.slane %v468, 4
        %v470 = vadd.f32 %v468, %v469
        %v471 = vrot.slane %v470, 2
        %v472 = vadd.f32 %v470, %v471
        %v473 = vrot.slane %v472, 1
        %v474 = vadd.f32 %v472, %v473
        %s475 = vtos %v474
        %s476 = scvt.s32.f32 %s386
        %s477 = ssub.f32 %s476, %s464
        %s478 = smul.f32 %s477, %s450
        %s479 = sadd.f32 %s475, %s478
        %p480 = scmp.gt.s32.totalorder %s386, 0
        %s481 = scalar_select %p480, %s479, 0.0
        %s482 = sadd.f32 %s397, %s481
        %vm483 = vcmp.eq.s32.totalorder %v349, 0
        %vm484 = vcmp.eq.s32.totalorder %v349, 1
        %vm485 = vcmp.eq.s32.totalorder %v349, 2
        %v486 = vstv %s382
        %v487 = vsel %vm485, %v486, 0.0
        %v488 = vstv %s482
        %v489 = vsel %vm484, %v488, %v487
        %v490 = vstv %s329
        %v491 = vsel %vm483, %v490, %v489
        %492 = vst [vmem:[%s294] sm:$0xff] %v491
        %s493 = sand.u32 %s136, 1
        %s494 = scalar_lea.sflag [#allocation4], %s493
        %s495 = sand.u32 %s136, 1
        %s496 = smul.addr %s495, 8
        %s497 = scalar_lea.vmem [#allocation8], %s496
        // Predicated region
        $region56: #{tpu_custom_call.1} parent=35 // pred_check
          %p498 = pneg %p146
        $region57: #{tpu_custom_call.1} parent=35 // pred_check_branch
          %500 = sbr.rel (%p498) target = $region59
        $region58: #{tpu_custom_call.1} parent=35 // pred_region
          %s502 = ssub.s32 128, 128
          %503 = vsyncadd %s494, %s502
          %s504 = smul.addr %s24, 128
          %s505 = scalar_lea.hbm %s4, %s504
          %s507 = sshll.u32 %s497, 4
          %s508 = int_to_ptr.vmem [resolvable:$true] %s507
          %510 = dma.vmem_to_hbm [thread:$0]  %s508, 128, %s505, %s494
        $region59: #{tpu_custom_call.1} parent=35 // pred_fallthru
          _
      $region36: #{tpu_custom_call.1} parent=5 // pred_fallthru
        _
      %p511 = scmp.le.s32.totalorder 2, %s19
      // Predicated region
      $region60: #{tpu_custom_call.1} parent=5 // pred_check
        %p512 = pneg %p511
      $region61: #{tpu_custom_call.1} parent=5 // pred_check_branch
        %514 = sbr.rel (%p512) target = $region63
      $region62: #{tpu_custom_call.1} parent=5 // pred_region
        %s515 = ssub.s32 %s19, 2
        // Predicated region
        $region64: #{tpu_custom_call.1} parent=62 // pred_check
          %p516 = pneg %p152
        $region65: #{tpu_custom_call.1} parent=62 // pred_check_branch
          %518 = sbr.rel (%p516) target = $region67
        $region66: #{tpu_custom_call.1} parent=62 // pred_region
          %s519 = sand.u32 %s137, 1
          %s520 = scalar_lea.sflag [#allocation4], %s519
          %s521 = sand.u32 %s137, 1
          %s522 = smul.addr %s521, 8
          %s523 = scalar_lea.vmem [#allocation8], %s522
          %524 = dma.done %s520, 128
        $region67: #{tpu_custom_call.1} parent=62 // pred_fallthru
          _
      $region63: #{tpu_custom_call.1} parent=5 // pred_fallthru
        _
    $region6: #{tpu_custom_call.1} parent=1 // loop_footer
      %s23 = sadd.s32 1, %s19
    $region7: #{tpu_custom_call.1} parent=1 // loop_footer_branch
      %18 = sbr.rel target = $region3
    $region8: #{tpu_custom_call.1} parent=1 // loop_exit
      _
    %525 = vsyncpa [#allocation3], 1
    %s526 = scalar_lea.sflag [#allocation3], 1
    %527 = vsyncpa %s526, 1
    %528 = vsyncpa [#allocation6], 1
    %s529 = scalar_lea.sflag [#allocation6], 1
    %530 = vsyncpa %s529, 1
    %531 = vsyncpa [#allocation4], 1
    %s532 = scalar_lea.sflag [#allocation4], 1
    %533 = vsyncpa %s532, 1

</llo_original>
